<compile_context>
chip_gen: v7x
topology: tpu7x:2x2x1
jax: 0.10.0
libtpu: 0.0.40
codegen_flags: <defaults>
</compile_context>

<pallas_src>
import functools

import jax
import jax.numpy as jnp
from jax.experimental import pallas as pl
from jax.experimental.pallas import tpu as pltpu


NEG_SLOPE = 0.01          # F.leaky_relu default negative_slope
IN_PAD = 128              # 100 -> 128 (lane-aligned contraction dim)
HID_PAD = 128             # 32/64 hidden widths -> 128 (lane-dense activations)
OUT_DIM = 784             # final width kept exact (= full last dim of output)
TM_CAP = 1024             # max batch-tile rows (fits v5e 16 MiB scoped VMEM)
LAYER_DIMS = [(100, 32), (32, 64), (64, 128), (128, 256), (256, 784)]


def _round_up(x, m):
    return (x + m - 1) // m * m


def _leaky_relu(x):
    # valid for 0 < NEG_SLOPE < 1: max(x, a*x) == leaky_relu(x)
    return jnp.maximum(x, NEG_SLOPE * x)


def generator_kernel(x_ref,
                     w0_ref, b0_ref,
                     w1_ref, b1_ref,
                     w2_ref, b2_ref,
                     w3_ref, b3_ref,
                     w4_ref, b4_ref,
                     o_ref):
    """One (TM, IN_PAD) bf16 batch tile -> (TM, OUT_DIM) output tile.

    Weights arrive as bf16 (in, out); biases as f32 (1, out). MXU accumulates
    in f32; all elementwise math stays f32.
    """
    h = x_ref[...]  # (TM, 128) bf16

    def layer(h, w_ref, b_ref):
        y = jnp.dot(h.astype(jnp.bfloat16), w_ref[...],
                    preferred_element_type=jnp.float32)
        return y + b_ref[...]

    # dense0..dense3 + leaky_relu (+ dropout: identity in eval mode).
    # Zero-padded hidden columns stay exactly 0 through leaky_relu.
    h = _leaky_relu(layer(h, w0_ref, b0_ref))
    h = _leaky_relu(layer(h, w1_ref, b1_ref))
    h = _leaky_relu(layer(h, w2_ref, b2_ref))
    h = _leaky_relu(layer(h, w3_ref, b3_ref))

    # dense4 + tanh, stored directly at width 784 (masked vst on last 16 lanes)
    o_ref[...] = jnp.tanh(layer(h, w4_ref, b4_ref)).astype(o_ref.dtype)


def init_params(key):
    """PyTorch-convention parameters: weight (out, in) f32, bias (out,) f32."""
    params = []
    for (fan_in, fan_out) in LAYER_DIMS:
        key, kw, kb = jax.random.split(key, 3)
        bound = 1.0 / jnp.sqrt(fan_in)
        w = jax.random.uniform(kw, (fan_out, fan_in), jnp.float32, -bound, bound)
        b = jax.random.uniform(kb, (fan_out,), jnp.float32, -bound, bound)
        params.append((w, b))
    return params


def prepare_params(params):
    """One-time prep: transpose to (in, out), zero-pad narrow dims, cast w->bf16.

    Padded shapes (all pads are zeros, so the math is unchanged):
      w0: (128, 128)  b0: (1, 128)     [in 100->128, out 32->128]
      w1: (128, 128)  b1: (1, 128)     [in  32->128, out 64->128]
      w2: (128, 128)  b2: (1, 128)     [in  64->128]
      w3: (128, 256)  b3: (1, 256)
      w4: (256, 784)  b4: (1, 784)
    """
    in_pads = [IN_PAD, HID_PAD, HID_PAD, 128, 256]
    out_pads = [HID_PAD, HID_PAD, 128, 256, OUT_DIM]
    prepared = []
    for (w, b), kp, np_ in zip(params, in_pads, out_pads):
        wt = w.T                            # (in, out)
        bb = b.reshape(1, -1)               # (1, out)
        wt = jnp.pad(wt, ((0, kp - wt.shape[0]), (0, np_ - wt.shape[1])))
        bb = jnp.pad(bb, ((0, 0), (0, np_ - bb.shape[1])))
        prepared.append((wt.astype(jnp.bfloat16), bb.astype(jnp.float32)))
    return prepared


@functools.partial(jax.jit, static_argnames=("out_dtype",))
def generator_forward(x, prepared_params, out_dtype=jnp.float32):
    """x: (B, 100) float32 -> (B, 28, 28) out_dtype (default float32)."""
    B = x.shape[0]

    # Batch tile: >=2 grid steps when possible (v7x dual-TC sharding), divide B
    # as evenly as possible under the cap (bounded padding, amortized per-step
    # overhead on v5e/v6e), multiple of 8 sublanes.
    n_steps = max(2, pl.cdiv(B, TM_CAP))
    TM = _round_up(max(1, pl.cdiv(B, n_steps)), 8)
    n_tiles = pl.cdiv(B, TM)
    B_pad = n_tiles * TM

    # Layout glue (once per call): features 100 -> 128, rows B -> B_pad, bf16.
    x_pad = jnp.pad(x.astype(jnp.bfloat16),
                    ((0, B_pad - B), (0, IN_PAD - x.shape[1])))

    flat_args = [x_pad]
    for (w, b) in prepared_params:
        flat_args.append(w)
        flat_args.append(b)

    # x / out tiles walk the batch grid; weights & biases are VMEM-resident.
    in_specs = [pl.BlockSpec((TM, IN_PAD), lambda i: (i, 0))]
    for (w, b) in prepared_params:
        in_specs.append(pl.BlockSpec(w.shape, lambda i: (0, 0)))
        in_specs.append(pl.BlockSpec(b.shape, lambda i: (0, 0)))
    out_spec = pl.BlockSpec((TM, OUT_DIM), lambda i: (i, 0))

    flops_per_row = 2 * (IN_PAD * HID_PAD + HID_PAD * HID_PAD + HID_PAD * 128
                         + 128 * 256 + 256 * OUT_DIM)
    param_bytes = sum(w.size * w.dtype.itemsize + b.size * b.dtype.itemsize
                      for (w, b) in prepared_params)
    out_itemsize = jnp.dtype(out_dtype).itemsize
    cost = pl.CostEstimate(
        flops=B_pad * flops_per_row,
        transcendentals=B_pad * OUT_DIM,                       # final tanh
        bytes_accessed=param_bytes + B_pad * (IN_PAD * 2 + OUT_DIM * out_itemsize),
    )

    out = pl.pallas_call(
        generator_kernel,
        out_shape=jax.ShapeDtypeStruct((B_pad, OUT_DIM), out_dtype),
        grid=(n_tiles,),
        in_specs=in_specs,
        out_specs=out_spec,
        compiler_params=pltpu.CompilerParams(
            dimension_semantics=("parallel",)),
        cost_estimate=cost,
    )(*flat_args)

    if B_pad != B:                 # static check: no-op slice when B tiles evenly
        out = out[:B]
    return out.reshape(B, 28, 28)  # row-major reshape -> bitcast, no HBM copy


def generator_reference(x, prepared_params):
    """Pure-JAX reference doing the same bf16-operand / f32-accumulate math."""
    B = x.shape[0]
    h = jnp.pad(x.astype(jnp.bfloat16), ((0, 0), (0, IN_PAD - x.shape[1])))
    n = len(prepared_params)
    for i, (w, b) in enumerate(prepared_params):
        h = jnp.dot(h.astype(jnp.bfloat16), w,
                    preferred_element_type=jnp.float32) + b
        if i < n - 1:
            h = jnp.maximum(h, NEG_SLOPE * h)
        else:
            h = jnp.tanh(h)
    return h.reshape(B, 28, 28)


if __name__ == "__main__":
    key = jax.random.PRNGKey(0)
    key, kx = jax.random.split(key)

    B = 2
    x = jax.random.normal(kx, (B, 100), dtype=jnp.float32)

    params = init_params(key)
    prepared = prepare_params(params)     # one-time: transpose / pad / bf16

    y = generator_forward(x, prepared)
    y = jax.block_until_ready(y)

    y_ref = generator_reference(x, prepared)
    assert y.shape == (B, 28, 28), y.shape
    assert y.dtype == jnp.float32, y.dtype
    assert jnp.allclose(y, y_ref, atol=2e-3, rtol=2e-3), "mismatch vs reference"

    print("KERNEL_OK")
</pallas_src>

<mosaic_0001>
module attributes {stable_mosaic.version = 11 : i64} {
  func.func @generator_kernel(%arg0: i32, %arg1: memref<8x128xbf16, #tpu.memory_space<vmem>>, %arg2: memref<128x128xbf16, #tpu.memory_space<vmem>>, %arg3: memref<1x128xf32, #tpu.memory_space<vmem>>, %arg4: memref<128x128xbf16, #tpu.memory_space<vmem>>, %arg5: memref<1x128xf32, #tpu.memory_space<vmem>>, %arg6: memref<128x128xbf16, #tpu.memory_space<vmem>>, %arg7: memref<1x128xf32, #tpu.memory_space<vmem>>, %arg8: memref<128x256xbf16, #tpu.memory_space<vmem>>, %arg9: memref<1x256xf32, #tpu.memory_space<vmem>>, %arg10: memref<256x784xbf16, #tpu.memory_space<vmem>>, %arg11: memref<1x784xf32, #tpu.memory_space<vmem>>, %arg12: memref<8x784xf32, #tpu.memory_space<vmem>>) attributes {dimension_semantics = [#tpu.dimension_semantics<parallel>], iteration_bounds = array<i64: 1>, scalar_prefetch = 0 : i64, scratch_operands = 0 : i64, tpu.core_type = #tpu.core_type<tc>, window_params = [{transform_indices = @transform_0, window_bounds = array<i64: 8, 128>}, {pipeline_mode = #tpu.pipeline_mode<synchronous>, transform_indices = @transform_1, window_bounds = array<i64: 128, 128>}, {pipeline_mode = #tpu.pipeline_mode<synchronous>, transform_indices = @transform_2, window_bounds = array<i64: 1, 128>}, {pipeline_mode = #tpu.pipeline_mode<synchronous>, transform_indices = @transform_3, window_bounds = array<i64: 128, 128>}, {pipeline_mode = #tpu.pipeline_mode<synchronous>, transform_indices = @transform_4, window_bounds = array<i64: 1, 128>}, {pipeline_mode = #tpu.pipeline_mode<synchronous>, transform_indices = @transform_5, window_bounds = array<i64: 128, 128>}, {pipeline_mode = #tpu.pipeline_mode<synchronous>, transform_indices = @transform_6, window_bounds = array<i64: 1, 128>}, {pipeline_mode = #tpu.pipeline_mode<synchronous>, transform_indices = @transform_7, window_bounds = array<i64: 128, 256>}, {pipeline_mode = #tpu.pipeline_mode<synchronous>, transform_indices = @transform_8, window_bounds = array<i64: 1, 256>}, {pipeline_mode = #tpu.pipeline_mode<synchronous>, transform_indices = @transform_9, window_bounds = array<i64: 256, 784>}, {pipeline_mode = #tpu.pipeline_mode<synchronous>, transform_indices = @transform_10, window_bounds = array<i64: 1, 784>}, {transform_indices = @transform_11, window_bounds = array<i64: 8, 784>}]} {
    %c0 = arith.constant 0 : index
    %c0_0 = arith.constant 0 : index
    %0 = vector.load %arg1[%c0, %c0_0] : memref<8x128xbf16, #tpu.memory_space<vmem>>, vector<8x128xbf16>
    %c0_1 = arith.constant 0 : index
    %c0_2 = arith.constant 0 : index
    %1 = vector.load %arg2[%c0_1, %c0_2] : memref<128x128xbf16, #tpu.memory_space<vmem>>, vector<128x128xbf16>
    %cst = arith.constant dense<0.000000e+00> : vector<8x128xf32>
    %2 = tpu.matmul %0, %1, %cst {dimension_numbers = #tpu.dot_dimension_numbers<[1], [0], [0], [1], [0, 0, 1, 1], [], []>} : vector<8x128xbf16>, vector<128x128xbf16>, vector<8x128xf32> -> vector<8x128xf32>
    %c0_3 = arith.constant 0 : index
    %c0_4 = arith.constant 0 : index
    %3 = vector.load %arg3[%c0_3, %c0_4] : memref<1x128xf32, #tpu.memory_space<vmem>>, vector<1x128xf32>
    %4 = vector.broadcast %3 : vector<1x128xf32> to vector<8x128xf32>
    %5 = arith.addf %2, %4 : vector<8x128xf32>
    %cst_5 = arith.constant 0.00999999977 : f32
    %6 = vector.broadcast %cst_5 : f32 to vector<8x128xf32>
    %7 = arith.mulf %6, %5 : vector<8x128xf32>
    %8 = arith.maximumf %5, %7 : vector<8x128xf32>
    %9 = arith.truncf %8 : vector<8x128xf32> to vector<8x128xbf16>
    %c0_6 = arith.constant 0 : index
    %c0_7 = arith.constant 0 : index
    %10 = vector.load %arg4[%c0_6, %c0_7] : memref<128x128xbf16, #tpu.memory_space<vmem>>, vector<128x128xbf16>
    %cst_8 = arith.constant dense<0.000000e+00> : vector<8x128xf32>
    %11 = tpu.matmul %9, %10, %cst_8 {dimension_numbers = #tpu.dot_dimension_numbers<[1], [0], [0], [1], [0, 0, 1, 1], [], []>} : vector<8x128xbf16>, vector<128x128xbf16>, vector<8x128xf32> -> vector<8x128xf32>
    %c0_9 = arith.constant 0 : index
    %c0_10 = arith.constant 0 : index
    %12 = vector.load %arg5[%c0_9, %c0_10] : memref<1x128xf32, #tpu.memory_space<vmem>>, vector<1x128xf32>
    %13 = vector.broadcast %12 : vector<1x128xf32> to vector<8x128xf32>
    %14 = arith.addf %11, %13 : vector<8x128xf32>
    %cst_11 = arith.constant 0.00999999977 : f32
    %15 = vector.broadcast %cst_11 : f32 to vector<8x128xf32>
    %16 = arith.mulf %15, %14 : vector<8x128xf32>
    %17 = arith.maximumf %14, %16 : vector<8x128xf32>
    %18 = arith.truncf %17 : vector<8x128xf32> to vector<8x128xbf16>
    %c0_12 = arith.constant 0 : index
    %c0_13 = arith.constant 0 : index
    %19 = vector.load %arg6[%c0_12, %c0_13] : memref<128x128xbf16, #tpu.memory_space<vmem>>, vector<128x128xbf16>
    %cst_14 = arith.constant dense<0.000000e+00> : vector<8x128xf32>
    %20 = tpu.matmul %18, %19, %cst_14 {dimension_numbers = #tpu.dot_dimension_numbers<[1], [0], [0], [1], [0, 0, 1, 1], [], []>} : vector<8x128xbf16>, vector<128x128xbf16>, vector<8x128xf32> -> vector<8x128xf32>
    %c0_15 = arith.constant 0 : index
    %c0_16 = arith.constant 0 : index
    %21 = vector.load %arg7[%c0_15, %c0_16] : memref<1x128xf32, #tpu.memory_space<vmem>>, vector<1x128xf32>
    %22 = vector.broadcast %21 : vector<1x128xf32> to vector<8x128xf32>
    %23 = arith.addf %20, %22 : vector<8x128xf32>
    %cst_17 = arith.constant 0.00999999977 : f32
    %24 = vector.broadcast %cst_17 : f32 to vector<8x128xf32>
    %25 = arith.mulf %24, %23 : vector<8x128xf32>
    %26 = arith.maximumf %23, %25 : vector<8x128xf32>
    %27 = arith.truncf %26 : vector<8x128xf32> to vector<8x128xbf16>
    %c0_18 = arith.constant 0 : index
    %c0_19 = arith.constant 0 : index
    %28 = vector.load %arg8[%c0_18, %c0_19] : memref<128x256xbf16, #tpu.memory_space<vmem>>, vector<128x256xbf16>
    %cst_20 = arith.constant dense<0.000000e+00> : vector<8x256xf32>
    %29 = tpu.matmul %27, %28, %cst_20 {dimension_numbers = #tpu.dot_dimension_numbers<[1], [0], [0], [1], [0, 0, 1, 1], [], []>} : vector<8x128xbf16>, vector<128x256xbf16>, vector<8x256xf32> -> vector<8x256xf32>
    %c0_21 = arith.constant 0 : index
    %c0_22 = arith.constant 0 : index
    %30 = vector.load %arg9[%c0_21, %c0_22] : memref<1x256xf32, #tpu.memory_space<vmem>>, vector<1x256xf32>
    %31 = vector.broadcast %30 : vector<1x256xf32> to vector<8x256xf32>
    %32 = arith.addf %29, %31 : vector<8x256xf32>
    %cst_23 = arith.constant 0.00999999977 : f32
    %33 = vector.broadcast %cst_23 : f32 to vector<8x256xf32>
    %34 = arith.mulf %33, %32 : vector<8x256xf32>
    %35 = arith.maximumf %32, %34 : vector<8x256xf32>
    %36 = arith.truncf %35 : vector<8x256xf32> to vector<8x256xbf16>
    %c0_24 = arith.constant 0 : index
    %c0_25 = arith.constant 0 : index
    %37 = vector.load %arg10[%c0_24, %c0_25] : memref<256x784xbf16, #tpu.memory_space<vmem>>, vector<256x784xbf16>
    %cst_26 = arith.constant dense<0.000000e+00> : vector<8x784xf32>
    %38 = tpu.matmul %36, %37, %cst_26 {dimension_numbers = #tpu.dot_dimension_numbers<[1], [0], [0], [1], [0, 0, 1, 1], [], []>} : vector<8x256xbf16>, vector<256x784xbf16>, vector<8x784xf32> -> vector<8x784xf32>
    %c0_27 = arith.constant 0 : index
    %c0_28 = arith.constant 0 : index
    %39 = vector.load %arg11[%c0_27, %c0_28] : memref<1x784xf32, #tpu.memory_space<vmem>>, vector<1x784xf32>
    %40 = vector.broadcast %39 : vector<1x784xf32> to vector<8x784xf32>
    %41 = arith.addf %38, %40 : vector<8x784xf32>
    %42 = math.tanh %41 : vector<8x784xf32>
    %c0_29 = arith.constant 0 : index
    %c0_30 = arith.constant 0 : index
    %43 = vector.load %arg12[%c0_29, %c0_30] : memref<8x784xf32, #tpu.memory_space<vmem>>, vector<8x784xf32>
    tpu.vector_store %arg12[%c0_29, %c0_30], %42 {strides = array<i32>} : memref<8x784xf32, #tpu.memory_space<vmem>>, vector<8x784xf32>,
    return
  }
  func.func @transform_0(%arg0: i32) -> (i32, i32) {
    %c0_i32 = arith.constant 0 : i32
    %c0_i32_0 = arith.constant 0 : i32
    return %arg0, %c0_i32 : i32, i32
  }
  func.func @transform_1(%arg0: i32) -> (i32, i32) {
    %c0_i32 = arith.constant 0 : i32
    %c0_i32_0 = arith.constant 0 : i32
    %c0_i32_1 = arith.constant 0 : i32
    return %c0_i32, %c0_i32_0 : i32, i32
  }
  func.func @transform_2(%arg0: i32) -> (i32, i32) {
    %c0_i32 = arith.constant 0 : i32
    %c0_i32_0 = arith.constant 0 : i32
    %c0_i32_1 = arith.constant 0 : i32
    return %c0_i32, %c0_i32_0 : i32, i32
  }
  func.func @transform_3(%arg0: i32) -> (i32, i32) {
    %c0_i32 = arith.constant 0 : i32
    %c0_i32_0 = arith.constant 0 : i32
    %c0_i32_1 = arith.constant 0 : i32
    return %c0_i32, %c0_i32_0 : i32, i32
  }
  func.func @transform_4(%arg0: i32) -> (i32, i32) {
    %c0_i32 = arith.constant 0 : i32
    %c0_i32_0 = arith.constant 0 : i32
    %c0_i32_1 = arith.constant 0 : i32
    return %c0_i32, %c0_i32_0 : i32, i32
  }
  func.func @transform_5(%arg0: i32) -> (i32, i32) {
    %c0_i32 = arith.constant 0 : i32
    %c0_i32_0 = arith.constant 0 : i32
    %c0_i32_1 = arith.constant 0 : i32
    return %c0_i32, %c0_i32_0 : i32, i32
  }
  func.func @transform_6(%arg0: i32) -> (i32, i32) {
    %c0_i32 = arith.constant 0 : i32
    %c0_i32_0 = arith.constant 0 : i32
    %c0_i32_1 = arith.constant 0 : i32
    return %c0_i32, %c0_i32_0 : i32, i32
  }
  func.func @transform_7(%arg0: i32) -> (i32, i32) {
    %c0_i32 = arith.constant 0 : i32
    %c0_i32_0 = arith.constant 0 : i32
    %c0_i32_1 = arith.constant 0 : i32
    return %c0_i32, %c0_i32_0 : i32, i32
  }
  func.func @transform_8(%arg0: i32) -> (i32, i32) {
    %c0_i32 = arith.constant 0 : i32
    %c0_i32_0 = arith.constant 0 : i32
    %c0_i32_1 = arith.constant 0 : i32
    return %c0_i32, %c0_i32_0 : i32, i32
  }
  func.func @transform_9(%arg0: i32) -> (i32, i32) {
    %c0_i32 = arith.constant 0 : i32
    %c0_i32_0 = arith.constant 0 : i32
    %c0_i32_1 = arith.constant 0 : i32
    return %c0_i32, %c0_i32_0 : i32, i32
  }
  func.func @transform_10(%arg0: i32) -> (i32, i32) {
    %c0_i32 = arith.constant 0 : i32
    %c0_i32_0 = arith.constant 0 : i32
    %c0_i32_1 = arith.constant 0 : i32
    return %c0_i32, %c0_i32_0 : i32, i32
  }
  func.func @transform_11(%arg0: i32) -> (i32, i32) {
    %c0_i32 = arith.constant 0 : i32
    %c0_i32_0 = arith.constant 0 : i32
    return %arg0, %c0_i32 : i32, i32
  }
}

</mosaic_0001>

<llo_original>
// kernel: generator_forward.1
$region0: #{generator_forward.1}
  #allocation0 [shape = 'u32[]', space=smem, size = 0x4, offset = 0x4, fixed_abs, tag = 'smem constant byte address 0x4 - core index']
  #allocation1 [shape = 'u32[144,128]{1,0:T(1,128)}', space=vmem, size = 0x12000, scoped, tag = 'internal scratch']
  %s0 = inlined_call_operand.vmem [shape: bf16[8,128], index: 0, kind: input, shape index: {}]
  %s1 = inlined_call_operand.vmem [shape: bf16[128,128], index: 1, kind: input, shape index: {}]
  %s2 = inlined_call_operand.vmem [shape: f32[1,128], index: 2, kind: input, shape index: {}]
  %s3 = inlined_call_operand.vmem [shape: bf16[128,128], index: 3, kind: input, shape index: {}]
  %s4 = inlined_call_operand.vmem [shape: f32[1,128], index: 4, kind: input, shape index: {}]
  %s5 = inlined_call_operand.vmem [shape: bf16[128,128], index: 5, kind: input, shape index: {}]
  %s6 = inlined_call_operand.vmem [shape: f32[1,128], index: 6, kind: input, shape index: {}]
  %s7 = inlined_call_operand.vmem [shape: bf16[128,256], index: 7, kind: input, shape index: {}]
  %s8 = inlined_call_operand.vmem [shape: f32[1,256], index: 8, kind: input, shape index: {}]
  %s9 = inlined_call_operand.vmem [shape: bf16[256,784], index: 9, kind: input, shape index: {}]
  %s10 = inlined_call_operand.vmem [shape: f32[1,784], index: 10, kind: input, shape index: {}]
  %s11 = inlined_call_operand.vmem [shape: f32[8,784], index: 11, kind: output, shape index: {}]
  %s12 = sld [smem:[#allocation0]]
  $region54: #{generator_forward.1} parent=0
    _
  %s14 = ssub.s32 1, %s12
  %s15 = scalar_select 0, %s14, %s12
  // Predicated region
  $region2: #{generator_forward.1} parent=0 // pred_check
    _
  $region3: #{generator_forward.1} parent=0 // pred_check_branch
    %17 = sbr.rel (0) target = $region5
  $region4: #{generator_forward.1} parent=0 // pred_region
    _
  $region5: #{generator_forward.1} parent=0 // pred_fallthru
    _
  // Predicated region
  $region6: #{generator_forward.1} parent=0 // pred_check
    _
  $region7: #{generator_forward.1} parent=0 // pred_check_branch
    %19 = sbr.rel (0) target = $region9
  $region8: #{generator_forward.1} parent=0 // pred_region
    _
  $region9: #{generator_forward.1} parent=0 // pred_fallthru
    _
  // Predicated region
  $region10: #{generator_forward.1} parent=0 // pred_check
    _
  $region11: #{generator_forward.1} parent=0 // pred_check_branch
    %21 = sbr.rel (0) target = $region13
  $region12: #{generator_forward.1} parent=0 // pred_region
    _
  $region13: #{generator_forward.1} parent=0 // pred_fallthru
    _
  // Predicated region
  $region14: #{generator_forward.1} parent=0 // pred_check
    _
  $region15: #{generator_forward.1} parent=0 // pred_check_branch
    %23 = sbr.rel (0) target = $region17
  $region16: #{generator_forward.1} parent=0 // pred_region
    _
  $region17: #{generator_forward.1} parent=0 // pred_fallthru
    _
  // Predicated region
  $region18: #{generator_forward.1} parent=0 // pred_check
    _
  $region19: #{generator_forward.1} parent=0 // pred_check_branch
    %25 = sbr.rel (0) target = $region21
  $region20: #{generator_forward.1} parent=0 // pred_region
    _
  $region21: #{generator_forward.1} parent=0 // pred_fallthru
    _
  // Predicated region
  $region22: #{generator_forward.1} parent=0 // pred_check
    _
  $region23: #{generator_forward.1} parent=0 // pred_check_branch
    %27 = sbr.rel (0) target = $region25
  $region24: #{generator_forward.1} parent=0 // pred_region
    _
  $region25: #{generator_forward.1} parent=0 // pred_fallthru
    _
  // Predicated region
  $region26: #{generator_forward.1} parent=0 // pred_check
    _
  $region27: #{generator_forward.1} parent=0 // pred_check_branch
    %29 = sbr.rel (0) target = $region29
  $region28: #{generator_forward.1} parent=0 // pred_region
    _
  $region29: #{generator_forward.1} parent=0 // pred_fallthru
    _
  // Predicated region
  $region30: #{generator_forward.1} parent=0 // pred_check
    _
  $region31: #{generator_forward.1} parent=0 // pred_check_branch
    %31 = sbr.rel (0) target = $region33
  $region32: #{generator_forward.1} parent=0 // pred_region
    _
  $region33: #{generator_forward.1} parent=0 // pred_fallthru
    _
  // Predicated region
  $region34: #{generator_forward.1} parent=0 // pred_check
    _
  $region35: #{generator_forward.1} parent=0 // pred_check_branch
    %33 = sbr.rel (0) target = $region37
  $region36: #{generator_forward.1} parent=0 // pred_region
    _
  $region37: #{generator_forward.1} parent=0 // pred_fallthru
    _
  // Predicated region
  $region38: #{generator_forward.1} parent=0 // pred_check
    _
  $region39: #{generator_forward.1} parent=0 // pred_check_branch
    %35 = sbr.rel (0) target = $region41
  $region40: #{generator_forward.1} parent=0 // pred_region
    _
  $region41: #{generator_forward.1} parent=0 // pred_fallthru
    _
  // Predicated region
  $region42: #{generator_forward.1} parent=0 // pred_check
    _
  $region43: #{generator_forward.1} parent=0 // pred_check_branch
    %37 = sbr.rel (0) target = $region45
  $region44: #{generator_forward.1} parent=0 // pred_region
    _
  $region45: #{generator_forward.1} parent=0 // pred_fallthru
    _
  %v39 = vld [vmem:[%s0] sm:$0xf]
  %v40 = vld [vmem:[%s1] sm:$0xf]
  %v41 = vld [vmem:[%s1 + $0x4] sm:$0xf]
  %v42 = vld [vmem:[%s1 + $0x8] sm:$0xf]
  %v43 = vld [vmem:[%s1 + $0xc] sm:$0xf]
  %v44 = vld [vmem:[%s1 + $0x10] sm:$0xf]
  %v45 = vld [vmem:[%s1 + $0x14] sm:$0xf]
  %v46 = vld [vmem:[%s1 + $0x18] sm:$0xf]
  %v47 = vld [vmem:[%s1 + $0x1c] sm:$0xf]
  %v48 = vld [vmem:[%s1 + $0x20] sm:$0xf]
  %v49 = vld [vmem:[%s1 + $0x24] sm:$0xf]
  %v50 = vld [vmem:[%s1 + $0x28] sm:$0xf]
  %v51 = vld [vmem:[%s1 + $0x2c] sm:$0xf]
  %v52 = vld [vmem:[%s1 + $0x30] sm:$0xf]
  %v53 = vld [vmem:[%s1 + $0x34] sm:$0xf]
  %v54 = vld [vmem:[%s1 + $0x38] sm:$0xf]
  %v55 = vld [vmem:[%s1 + $0x3c] sm:$0xf]
  %v56 = vld [vmem:[%s2] sm:$0x1]
  %v58 = vlaneseq
  %v59 = vshrl.u32 %v58, 7
  %v60 = vsub.s32 0, %v59
  %v61 = vrot.slane %v56, %v60
  %v79 = vunpack.c.l.b16 %v40
  %v80 = vunpack.c.l.b16 %v41
  %v81 = vunpack.c.l.b16 %v42
  %v82 = vunpack.c.l.b16 %v43
  %v83 = vunpack.c.l.b16 %v44
  %v84 = vunpack.c.l.b16 %v45
  %v85 = vunpack.c.l.b16 %v46
  %v86 = vunpack.c.l.b16 %v47
  %v87 = vunpack.c.l.b16 %v48
  %v88 = vunpack.c.l.b16 %v49
  %v89 = vunpack.c.l.b16 %v50
  %v90 = vunpack.c.l.b16 %v51
  %v91 = vunpack.c.l.b16 %v52
  %v92 = vunpack.c.l.b16 %v53
  %v93 = vunpack.c.l.b16 %v54
  %v94 = vunpack.c.l.b16 %v55
  %v95 = vpack.c.b16 %v80, %v79
  %v96 = vpack.c.b16 %v82, %v81
  %v97 = vpack.c.b16 %v84, %v83
  %v98 = vpack.c.b16 %v86, %v85
  %v99 = vpack.c.b16 %v88, %v87
  %v100 = vpack.c.b16 %v90, %v89
  %v101 = vpack.c.b16 %v92, %v91
  %v102 = vpack.c.b16 %v94, %v93
  %111 = vmatprep.subr.bf16.mxu0 0
  %112 = vmatpush1.bf16.msra.mxu0 %v95
  %113 = vmatprep.subr.bf16.mxu0 0
  %114 = vmatpush1.bf16.msra.mxu0 %v96
  %115 = vmatprep.subr.bf16.mxu0 0
  %116 = vmatpush1.bf16.msra.mxu0 %v97
  %117 = vmatprep.subr.bf16.mxu0 0
  %118 = vmatpush1.bf16.msra.mxu0 %v98
  %119 = vmatprep.subr.bf16.mxu0 0
  %120 = vmatpush1.bf16.msra.mxu0 %v99
  %121 = vmatprep.subr.bf16.mxu0 0
  %122 = vmatpush1.bf16.msra.mxu0 %v100
  %123 = vmatprep.subr.bf16.mxu0 0
  %124 = vmatpush1.bf16.msra.mxu0 %v101
  %125 = vmatprep.subr.bf16.mxu0 0
  %126 = vmatpush1.bf16.msra.mxu0 %v102
  %127 = vmatprep.subr.bf16.mxu0 0
  %128 = vmatpush1.bf16.msra.mxu0 0
  %129 = vmatprep.subr.bf16.mxu0 0
  %130 = vmatpush1.bf16.msra.mxu0 0
  %131 = vmatprep.subr.bf16.mxu0 0
  %132 = vmatpush1.bf16.msra.mxu0 0
  %133 = vmatprep.subr.bf16.mxu0 0
  %134 = vmatpush1.bf16.msra.mxu0 0
  %135 = vmatprep.subr.bf16.mxu0 0
  %136 = vmatpush1.bf16.msra.mxu0 0
  %137 = vmatprep.subr.bf16.mxu0 0
  %138 = vmatpush1.bf16.msra.mxu0 0
  %139 = vmatprep.subr.bf16.mxu0 0
  %140 = vmatpush1.bf16.msra.mxu0 0
  %141 = vmatprep.subr.bf16.mxu0 0
  %142 = vmatpush1.bf16.msra.mxu0 0
  %143 = vmatprep.mubr.bf16.mxu0 0
  %144 = vmatmul.mubr.bf16.gmra.mrb[0].mxu0 %v39
  %v145 = vpop.f32.mrb[0].mxu0
  %v146 = vadd.f32 %v61, %v145
  %v147 = vpop.f32.mrb[0].mxu0
  %v148 = vpop.f32.mrb[0].mxu0
  %v149 = vpop.f32.mrb[0].mxu0
  %150 = vdwg.mxu0
  %v151 = vmul.f32 %v146, 0.01
  %v152 = vmax.f32 %v146, %v151
  %v153 = vpack.c.bf16 %v152, %v152
  %v154 = vld [vmem:[%s3] sm:$0xf]
  %v155 = vld [vmem:[%s3 + $0x4] sm:$0xf]
  %v156 = vld [vmem:[%s3 + $0x8] sm:$0xf]
  %v157 = vld [vmem:[%s3 + $0xc] sm:$0xf]
  %v158 = vld [vmem:[%s3 + $0x10] sm:$0xf]
  %v159 = vld [vmem:[%s3 + $0x14] sm:$0xf]
  %v160 = vld [vmem:[%s3 + $0x18] sm:$0xf]
  %v161 = vld [vmem:[%s3 + $0x1c] sm:$0xf]
  %v162 = vld [vmem:[%s3 + $0x20] sm:$0xf]
  %v163 = vld [vmem:[%s3 + $0x24] sm:$0xf]
  %v164 = vld [vmem:[%s3 + $0x28] sm:$0xf]
  %v165 = vld [vmem:[%s3 + $0x2c] sm:$0xf]
  %v166 = vld [vmem:[%s3 + $0x30] sm:$0xf]
  %v167 = vld [vmem:[%s3 + $0x34] sm:$0xf]
  %v168 = vld [vmem:[%s3 + $0x38] sm:$0xf]
  %v169 = vld [vmem:[%s3 + $0x3c] sm:$0xf]
  %v170 = vld [vmem:[%s4] sm:$0x1]
  %v172 = vlaneseq
  %v173 = vshrl.u32 %v172, 7
  %v174 = vsub.s32 0, %v173
  %v175 = vrot.slane %v170, %v174
  %v193 = vunpack.c.l.b16 %v154
  %v194 = vunpack.c.l.b16 %v155
  %v195 = vunpack.c.l.b16 %v156
  %v196 = vunpack.c.l.b16 %v157
  %v197 = vunpack.c.l.b16 %v158
  %v198 = vunpack.c.l.b16 %v159
  %v199 = vunpack.c.l.b16 %v160
  %v200 = vunpack.c.l.b16 %v161
  %v201 = vunpack.c.l.b16 %v162
  %v202 = vunpack.c.l.b16 %v163
  %v203 = vunpack.c.l.b16 %v164
  %v204 = vunpack.c.l.b16 %v165
  %v205 = vunpack.c.l.b16 %v166
  %v206 = vunpack.c.l.b16 %v167
  %v207 = vunpack.c.l.b16 %v168
  %v208 = vunpack.c.l.b16 %v169
  %v209 = vpack.c.b16 %v194, %v193
  %v210 = vpack.c.b16 %v196, %v195
  %v211 = vpack.c.b16 %v198, %v197
  %v212 = vpack.c.b16 %v200, %v199
  %v213 = vpack.c.b16 %v202, %v201
  %v214 = vpack.c.b16 %v204, %v203
  %v215 = vpack.c.b16 %v206, %v205
  %v216 = vpack.c.b16 %v208, %v207
  %225 = vmatprep.subr.bf16.mxu0 0
  %226 = vmatpush1.bf16.msra.mxu0 %v209
  %227 = vmatprep.subr.bf16.mxu0 0
  %228 = vmatpush1.bf16.msra.mxu0 %v210
  %229 = vmatprep.subr.bf16.mxu0 0
  %230 = vmatpush1.bf16.msra.mxu0 %v211
  %231 = vmatprep.subr.bf16.mxu0 0
  %232 = vmatpush1.bf16.msra.mxu0 %v212
  %233 = vmatprep.subr.bf16.mxu0 0
  %234 = vmatpush1.bf16.msra.mxu0 %v213
  %235 = vmatprep.subr.bf16.mxu0 0
  %236 = vmatpush1.bf16.msra.mxu0 %v214
  %237 = vmatprep.subr.bf16.mxu0 0
  %238 = vmatpush1.bf16.msra.mxu0 %v215
  %239 = vmatprep.subr.bf16.mxu0 0
  %240 = vmatpush1.bf16.msra.mxu0 %v216
  %241 = vmatprep.subr.bf16.mxu0 0
  %242 = vmatpush1.bf16.msra.mxu0 0
  %243 = vmatprep.subr.bf16.mxu0 0
  %244 = vmatpush1.bf16.msra.mxu0 0
  %245 = vmatprep.subr.bf16.mxu0 0
  %246 = vmatpush1.bf16.msra.mxu0 0
  %247 = vmatprep.subr.bf16.mxu0 0
  %248 = vmatpush1.bf16.msra.mxu0 0
  %249 = vmatprep.subr.bf16.mxu0 0
  %250 = vmatpush1.bf16.msra.mxu0 0
  %251 = vmatprep.subr.bf16.mxu0 0
  %252 = vmatpush1.bf16.msra.mxu0 0
  %253 = vmatprep.subr.bf16.mxu0 0
  %254 = vmatpush1.bf16.msra.mxu0 0
  %255 = vmatprep.subr.bf16.mxu0 0
  %256 = vmatpush1.bf16.msra.mxu0 0
  %257 = vmatprep.mubr.bf16.mxu0 0
  %258 = vmatmul.mubr.bf16.gmra.mrb[0].mxu0 %v153
  %v259 = vpop.f32.mrb[0].mxu0
  %v260 = vadd.f32 %v175, %v259
  %v261 = vpop.f32.mrb[0].mxu0
  %v262 = vpop.f32.mrb[0].mxu0
  %v263 = vpop.f32.mrb[0].mxu0
  %264 = vdwg.mxu0
  %v265 = vmul.f32 %v260, 0.01
  %v266 = vmax.f32 %v260, %v265
  %v267 = vpack.c.bf16 %v266, %v266
  %v268 = vld [vmem:[%s5] sm:$0xf]
  %v269 = vld [vmem:[%s5 + $0x4] sm:$0xf]
  %v270 = vld [vmem:[%s5 + $0x8] sm:$0xf]
  %v271 = vld [vmem:[%s5 + $0xc] sm:$0xf]
  %v272 = vld [vmem:[%s5 + $0x10] sm:$0xf]
  %v273 = vld [vmem:[%s5 + $0x14] sm:$0xf]
  %v274 = vld [vmem:[%s5 + $0x18] sm:$0xf]
  %v275 = vld [vmem:[%s5 + $0x1c] sm:$0xf]
  %v276 = vld [vmem:[%s5 + $0x20] sm:$0xf]
  %v277 = vld [vmem:[%s5 + $0x24] sm:$0xf]
  %v278 = vld [vmem:[%s5 + $0x28] sm:$0xf]
  %v279 = vld [vmem:[%s5 + $0x2c] sm:$0xf]
  %v280 = vld [vmem:[%s5 + $0x30] sm:$0xf]
  %v281 = vld [vmem:[%s5 + $0x34] sm:$0xf]
  %v282 = vld [vmem:[%s5 + $0x38] sm:$0xf]
  %v283 = vld [vmem:[%s5 + $0x3c] sm:$0xf]
  %v284 = vld [vmem:[%s6] sm:$0x1]
  %v286 = vlaneseq
  %v287 = vshrl.u32 %v286, 7
  %v288 = vsub.s32 0, %v287
  %v289 = vrot.slane %v284, %v288
  %v307 = vunpack.c.l.b16 %v268
  %v308 = vunpack.c.l.b16 %v269
  %v309 = vunpack.c.l.b16 %v270
  %v310 = vunpack.c.l.b16 %v271
  %v311 = vunpack.c.l.b16 %v272
  %v312 = vunpack.c.l.b16 %v273
  %v313 = vunpack.c.l.b16 %v274
  %v314 = vunpack.c.l.b16 %v275
  %v315 = vunpack.c.l.b16 %v276
  %v316 = vunpack.c.l.b16 %v277
  %v317 = vunpack.c.l.b16 %v278
  %v318 = vunpack.c.l.b16 %v279
  %v319 = vunpack.c.l.b16 %v280
  %v320 = vunpack.c.l.b16 %v281
  %v321 = vunpack.c.l.b16 %v282
  %v322 = vunpack.c.l.b16 %v283
  %v323 = vpack.c.b16 %v308, %v307
  %v324 = vpack.c.b16 %v310, %v309
  %v325 = vpack.c.b16 %v312, %v311
  %v326 = vpack.c.b16 %v314, %v313
  %v327 = vpack.c.b16 %v316, %v315
  %v328 = vpack.c.b16 %v318, %v317
  %v329 = vpack.c.b16 %v320, %v319
  %v330 = vpack.c.b16 %v322, %v321
  %339 = vmatprep.subr.bf16.mxu0 0
  %340 = vmatpush1.bf16.msra.mxu0 %v323
  %341 = vmatprep.subr.bf16.mxu0 0
  %342 = vmatpush1.bf16.msra.mxu0 %v324
  %343 = vmatprep.subr.bf16.mxu0 0
  %344 = vmatpush1.bf16.msra.mxu0 %v325
  %345 = vmatprep.subr.bf16.mxu0 0
  %346 = vmatpush1.bf16.msra.mxu0 %v326
  %347 = vmatprep.subr.bf16.mxu0 0
  %348 = vmatpush1.bf16.msra.mxu0 %v327
  %349 = vmatprep.subr.bf16.mxu0 0
  %350 = vmatpush1.bf16.msra.mxu0 %v328
  %351 = vmatprep.subr.bf16.mxu0 0
  %352 = vmatpush1.bf16.msra.mxu0 %v329
  %353 = vmatprep.subr.bf16.mxu0 0
  %354 = vmatpush1.bf16.msra.mxu0 %v330
  %355 = vmatprep.subr.bf16.mxu0 0
  %356 = vmatpush1.bf16.msra.mxu0 0
  %357 = vmatprep.subr.bf16.mxu0 0
  %358 = vmatpush1.bf16.msra.mxu0 0
  %359 = vmatprep.subr.bf16.mxu0 0
  %360 = vmatpush1.bf16.msra.mxu0 0
  %361 = vmatprep.subr.bf16.mxu0 0
  %362 = vmatpush1.bf16.msra.mxu0 0
  %363 = vmatprep.subr.bf16.mxu0 0
  %364 = vmatpush1.bf16.msra.mxu0 0
  %365 = vmatprep.subr.bf16.mxu0 0
  %366 = vmatpush1.bf16.msra.mxu0 0
  %367 = vmatprep.subr.bf16.mxu0 0
  %368 = vmatpush1.bf16.msra.mxu0 0
  %369 = vmatprep.subr.bf16.mxu0 0
  %370 = vmatpush1.bf16.msra.mxu0 0
  %371 = vmatprep.mubr.bf16.mxu0 0
  %372 = vmatmul.mubr.bf16.gmra.mrb[0].mxu0 %v267
  %v373 = vpop.f32.mrb[0].mxu0
  %v374 = vadd.f32 %v289, %v373
  %v375 = vpop.f32.mrb[0].mxu0
  %v376 = vpop.f32.mrb[0].mxu0
  %v377 = vpop.f32.mrb[0].mxu0
  %378 = vdwg.mxu0
  %v379 = vmul.f32 %v374, 0.01
  %v380 = vmax.f32 %v374, %v379
  %v381 = vpack.c.bf16 %v380, %v380
  %v382 = vld [vmem:[%s7] sm:$0xff]
  %v383 = vld [vmem:[%s7 + $0x8] sm:$0xff]
  %v384 = vld [vmem:[%s7 + $0x10] sm:$0xff]
  %v385 = vld [vmem:[%s7 + $0x18] sm:$0xff]
  %v386 = vld [vmem:[%s7 + $0x20] sm:$0xff]
  %v387 = vld [vmem:[%s7 + $0x28] sm:$0xff]
  %v388 = vld [vmem:[%s7 + $0x30] sm:$0xff]
  %v389 = vld [vmem:[%s7 + $0x38] sm:$0xff]
  %v390 = vld [vmem:[%s7 + $0x40] sm:$0xff]
  %v391 = vld [vmem:[%s7 + $0x48] sm:$0xff]
  %v392 = vld [vmem:[%s7 + $0x50] sm:$0xff]
  %v393 = vld [vmem:[%s7 + $0x58] sm:$0xff]
  %v394 = vld [vmem:[%s7 + $0x60] sm:$0xff]
  %v395 = vld [vmem:[%s7 + $0x68] sm:$0xff]
  %v396 = vld [vmem:[%s7 + $0x70] sm:$0xff]
  %v397 = vld [vmem:[%s7 + $0x78] sm:$0xff]
  %v398 = vld [vmem:[%s8] sm:$0x3]
  %v400 = vlaneseq
  %v401 = vshrl.u32 %v400, 7
  %v402 = vsub.s32 0, %v401
  %v403 = vrot.slane %v398, %v402
  %v404 = vlaneseq
  %v405 = vshrl.u32 %v404, 7
  %v406 = vsub.s32 1, %v405
  %v407 = vrot.slane %v398, %v406
  %v426 = vunpack.c.l.b16 %v382
  %v427 = vunpack.c.h.b16 %v382
  %v428 = vunpack.c.l.b16 %v383
  %v429 = vunpack.c.h.b16 %v383
  %v430 = vunpack.c.l.b16 %v384
  %v431 = vunpack.c.h.b16 %v384
  %v432 = vunpack.c.l.b16 %v385
  %v433 = vunpack.c.h.b16 %v385
  %v434 = vunpack.c.l.b16 %v386
  %v435 = vunpack.c.h.b16 %v386
  %v436 = vunpack.c.l.b16 %v387
  %v437 = vunpack.c.h.b16 %v387
  %v438 = vunpack.c.l.b16 %v388
  %v439 = vunpack.c.h.b16 %v388
  %v440 = vunpack.c.l.b16 %v389
  %v441 = vunpack.c.h.b16 %v389
  %v442 = vunpack.c.l.b16 %v390
  %v443 = vunpack.c.h.b16 %v390
  %v444 = vunpack.c.l.b16 %v391
  %v445 = vunpack.c.h.b16 %v391
  %v446 = vunpack.c.l.b16 %v392
  %v447 = vunpack.c.h.b16 %v392
  %v448 = vunpack.c.l.b16 %v393
  %v449 = vunpack.c.h.b16 %v393
  %v450 = vunpack.c.l.b16 %v394
  %v451 = vunpack.c.h.b16 %v394
  %v452 = vunpack.c.l.b16 %v395
  %v453 = vunpack.c.h.b16 %v395
  %v454 = vunpack.c.l.b16 %v396
  %v455 = vunpack.c.h.b16 %v396
  %v456 = vunpack.c.l.b16 %v397
  %v457 = vunpack.c.h.b16 %v397
  %v458 = vpack.c.b16 %v428, %v426
  %v459 = vpack.c.b16 %v429, %v427
  %v460 = vpack.c.b16 %v432, %v430
  %v461 = vpack.c.b16 %v433, %v431
  %v462 = vpack.c.b16 %v436, %v434
  %v463 = vpack.c.b16 %v437, %v435
  %v464 = vpack.c.b16 %v440, %v438
  %v465 = vpack.c.b16 %v441, %v439
  %v466 = vpack.c.b16 %v444, %v442
  %v467 = vpack.c.b16 %v445, %v443
  %v468 = vpack.c.b16 %v448, %v446
  %v469 = vpack.c.b16 %v449, %v447
  %v470 = vpack.c.b16 %v452, %v450
  %v471 = vpack.c.b16 %v453, %v451
  %v472 = vpack.c.b16 %v456, %v454
  %v473 = vpack.c.b16 %v457, %v455
  %490 = vmatprep.subr.bf16.mxu0 %v459
  %491 = vmatpush1.bf16.msra.mxu0 %v458
  %492 = vmatprep.subr.bf16.mxu0 %v461
  %493 = vmatpush1.bf16.msra.mxu0 %v460
  %494 = vmatprep.subr.bf16.mxu0 %v463
  %495 = vmatpush1.bf16.msra.mxu0 %v462
  %496 = vmatprep.subr.bf16.mxu0 %v465
  %497 = vmatpush1.bf16.msra.mxu0 %v464
  %498 = vmatprep.subr.bf16.mxu0 %v467
  %499 = vmatpush1.bf16.msra.mxu0 %v466
  %500 = vmatprep.subr.bf16.mxu0 %v469
  %501 = vmatpush1.bf16.msra.mxu0 %v468
  %502 = vmatprep.subr.bf16.mxu0 %v471
  %503 = vmatpush1.bf16.msra.mxu0 %v470
  %504 = vmatprep.subr.bf16.mxu0 %v473
  %505 = vmatpush1.bf16.msra.mxu0 %v472
  %506 = vmatprep.subr.bf16.mxu0 0
  %507 = vmatpush1.bf16.msra.mxu0 0
  %508 = vmatprep.subr.bf16.mxu0 0
  %509 = vmatpush1.bf16.msra.mxu0 0
  %510 = vmatprep.subr.bf16.mxu0 0
  %511 = vmatpush1.bf16.msra.mxu0 0
  %512 = vmatprep.subr.bf16.mxu0 0
  %513 = vmatpush1.bf16.msra.mxu0 0
  %514 = vmatprep.subr.bf16.mxu0 0
  %515 = vmatpush1.bf16.msra.mxu0 0
  %516 = vmatprep.subr.bf16.mxu0 0
  %517 = vmatpush1.bf16.msra.mxu0 0
  %518 = vmatprep.subr.bf16.mxu0 0
  %519 = vmatpush1.bf16.msra.mxu0 0
  %520 = vmatprep.subr.bf16.mxu0 0
  %521 = vmatpush1.bf16.msra.mxu0 0
  %522 = vmatprep.mubr.bf16.mxu0 0
  %523 = vmatmul.mubr.bf16.gmra.mrb[0].mxu0 %v381
  %v524 = vpop.f32.mrb[0].mxu0
  %v525 = vadd.f32 %v403, %v524
  %v526 = vpop.f32.mrb[0].mxu0
  %v527 = vadd.f32 %v407, %v526
  %v528 = vpop.f32.mrb[0].mxu0
  %v529 = vpop.f32.mrb[0].mxu0
  %530 = vdwg.mxu0
  %v531 = vmul.f32 %v525, 0.01
  %v532 = vmul.f32 %v527, 0.01
  %v533 = vmax.f32 %v525, %v531
  %v534 = vmax.f32 %v527, %v532
  %v535 = vpack.c.bf16 %v533, %v533
  %v536 = vpack.c.bf16 %v534, %v534
  %v537 = vld [vmem:[%s9] sm:$0xff]
  %v538 = vld [vmem:[%s9 + $0x8] sm:$0xff]
  %v539 = vld [vmem:[%s9 + $0x10] sm:$0xff]
  %v540 = vld [vmem:[%s9 + $0x18] sm:$0xf]
  %v541 = vld [vmem:[%s9 + $0x1c] sm:$0xff]
  %v542 = vld [vmem:[%s9 + $0x24] sm:$0xff]
  %v543 = vld [vmem:[%s9 + $0x2c] sm:$0xff]
  %v544 = vld [vmem:[%s9 + $0x34] sm:$0xf]
  %v545 = vld [vmem:[%s9 + $0x38] sm:$0xff]
  %v546 = vld [vmem:[%s9 + $0x40] sm:$0xff]
  %v547 = vld [vmem:[%s9 + $0x48] sm:$0xff]
  %v548 = vld [vmem:[%s9 + $0x50] sm:$0xf]
  %v549 = vld [vmem:[%s9 + $0x54] sm:$0xff]
  %v550 = vld [vmem:[%s9 + $0x5c] sm:$0xff]
  %v551 = vld [vmem:[%s9 + $0x64] sm:$0xff]
  %v552 = vld [vmem:[%s9 + $0x6c] sm:$0xf]
  %v553 = vld [vmem:[%s9 + $0x70] sm:$0xff]
  %v554 = vld [vmem:[%s9 + $0x78] sm:$0xff]
  %v555 = vld [vmem:[%s9 + $0x80] sm:$0xff]
  %v556 = vld [vmem:[%s9 + $0x88] sm:$0xf]
  %v557 = vld [vmem:[%s9 + $0x8c] sm:$0xff]
  %v558 = vld [vmem:[%s9 + $0x94] sm:$0xff]
  %v559 = vld [vmem:[%s9 + $0x9c] sm:$0xff]
  %v560 = vld [vmem:[%s9 + $0xa4] sm:$0xf]
  %v561 = vld [vmem:[%s9 + $0xa8] sm:$0xff]
  %v562 = vld [vmem:[%s9 + $0xb0] sm:$0xff]
  %v563 = vld [vmem:[%s9 + $0xb8] sm:$0xff]
  %v564 = vld [vmem:[%s9 + $0xc0] sm:$0xf]
  %v565 = vld [vmem:[%s9 + $0xc4] sm:$0xff]
  %v566 = vld [vmem:[%s9 + $0xcc] sm:$0xff]
  %v567 = vld [vmem:[%s9 + $0xd4] sm:$0xff]
  %v568 = vld [vmem:[%s9 + $0xdc] sm:$0xf]
  %v569 = vld [vmem:[%s9 + $0xe0] sm:$0xff]
  %v570 = vld [vmem:[%s9 + $0xe8] sm:$0xff]
  %v571 = vld [vmem:[%s9 + $0xf0] sm:$0xff]
  %v572 = vld [vmem:[%s9 + $0xf8] sm:$0xf]
  %v573 = vld [vmem:[%s9 + $0xfc] sm:$0xff]
  %v574 = vld [vmem:[%s9 + $0x104] sm:$0xff]
  %v575 = vld [vmem:[%s9 + $0x10c] sm:$0xff]
  %v576 = vld [vmem:[%s9 + $0x114] sm:$0xf]
  %v577 = vld [vmem:[%s9 + $0x118] sm:$0xff]
  %v578 = vld [vmem:[%s9 + $0x120] sm:$0xff]
  %v579 = vld [vmem:[%s9 + $0x128] sm:$0xff]
  %v580 = vld [vmem:[%s9 + $0x130] sm:$0xf]
  %v581 = vld [vmem:[%s9 + $0x134] sm:$0xff]
  %v582 = vld [vmem:[%s9 + $0x13c] sm:$0xff]
  %v583 = vld [vmem:[%s9 + $0x144] sm:$0xff]
  %v584 = vld [vmem:[%s9 + $0x14c] sm:$0xf]
  %v585 = vld [vmem:[%s9 + $0x150] sm:$0xff]
  %v586 = vld [vmem:[%s9 + $0x158] sm:$0xff]
  %v587 = vld [vmem:[%s9 + $0x160] sm:$0xff]
  %v588 = vld [vmem:[%s9 + $0x168] sm:$0xf]
  %v589 = vld [vmem:[%s9 + $0x16c] sm:$0xff]
  %v590 = vld [vmem:[%s9 + $0x174] sm:$0xff]
  %v591 = vld [vmem:[%s9 + $0x17c] sm:$0xff]
  %v592 = vld [vmem:[%s9 + $0x184] sm:$0xf]
  %v593 = vld [vmem:[%s9 + $0x188] sm:$0xff]
  %v594 = vld [vmem:[%s9 + $0x190] sm:$0xff]
  %v595 = vld [vmem:[%s9 + $0x198] sm:$0xff]
  %v596 = vld [vmem:[%s9 + $0x1a0] sm:$0xf]
  %v597 = vld [vmem:[%s9 + $0x1a4] sm:$0xff]
  %v598 = vld [vmem:[%s9 + $0x1ac] sm:$0xff]
  %v599 = vld [vmem:[%s9 + $0x1b4] sm:$0xff]
  %v600 = vld [vmem:[%s9 + $0x1bc] sm:$0xf]
  %v601 = vld [vmem:[%s9 + $0x1c0] sm:$0xff]
  %v602 = vld [vmem:[%s9 + $0x1c8] sm:$0xff]
  %v603 = vld [vmem:[%s9 + $0x1d0] sm:$0xff]
  %v604 = vld [vmem:[%s9 + $0x1d8] sm:$0xf]
  %v605 = vld [vmem:[%s9 + $0x1dc] sm:$0xff]
  %v606 = vld [vmem:[%s9 + $0x1e4] sm:$0xff]
  %v607 = vld [vmem:[%s9 + $0x1ec] sm:$0xff]
  %v608 = vld [vmem:[%s9 + $0x1f4] sm:$0xf]
  %v609 = vld [vmem:[%s9 + $0x1f8] sm:$0xff]
  %v610 = vld [vmem:[%s9 + $0x200] sm:$0xff]
  %v611 = vld [vmem:[%s9 + $0x208] sm:$0xff]
  %v612 = vld [vmem:[%s9 + $0x210] sm:$0xf]
  %v613 = vld [vmem:[%s9 + $0x214] sm:$0xff]
  %v614 = vld [vmem:[%s9 + $0x21c] sm:$0xff]
  %v615 = vld [vmem:[%s9 + $0x224] sm:$0xff]
  %v616 = vld [vmem:[%s9 + $0x22c] sm:$0xf]
  %v617 = vld [vmem:[%s9 + $0x230] sm:$0xff]
  %v618 = vld [vmem:[%s9 + $0x238] sm:$0xff]
  %v619 = vld [vmem:[%s9 + $0x240] sm:$0xff]
  %v620 = vld [vmem:[%s9 + $0x248] sm:$0xf]
  %v621 = vld [vmem:[%s9 + $0x24c] sm:$0xff]
  %v622 = vld [vmem:[%s9 + $0x254] sm:$0xff]
  %v623 = vld [vmem:[%s9 + $0x25c] sm:$0xff]
  %v624 = vld [vmem:[%s9 + $0x264] sm:$0xf]
  %v625 = vld [vmem:[%s9 + $0x268] sm:$0xff]
  %v626 = vld [vmem:[%s9 + $0x270] sm:$0xff]
  %v627 = vld [vmem:[%s9 + $0x278] sm:$0xff]
  %v628 = vld [vmem:[%s9 + $0x280] sm:$0xf]
  %v629 = vld [vmem:[%s9 + $0x284] sm:$0xff]
  %v630 = vld [vmem:[%s9 + $0x28c] sm:$0xff]
  %v631 = vld [vmem:[%s9 + $0x294] sm:$0xff]
  %v632 = vld [vmem:[%s9 + $0x29c] sm:$0xf]
  %v633 = vld [vmem:[%s9 + $0x2a0] sm:$0xff]
  %v634 = vld [vmem:[%s9 + $0x2a8] sm:$0xff]
  %v635 = vld [vmem:[%s9 + $0x2b0] sm:$0xff]
  %v636 = vld [vmem:[%s9 + $0x2b8] sm:$0xf]
  %v637 = vld [vmem:[%s9 + $0x2bc] sm:$0xff]
  %v638 = vld [vmem:[%s9 + $0x2c4] sm:$0xff]
  %v639 = vld [vmem:[%s9 + $0x2cc] sm:$0xff]
  %v640 = vld [vmem:[%s9 + $0x2d4] sm:$0xf]
  %v641 = vld [vmem:[%s9 + $0x2d8] sm:$0xff]
  %v642 = vld [vmem:[%s9 + $0x2e0] sm:$0xff]
  %v643 = vld [vmem:[%s9 + $0x2e8] sm:$0xff]
  %v644 = vld [vmem:[%s9 + $0x2f0] sm:$0xf]
  %v645 = vld [vmem:[%s9 + $0x2f4] sm:$0xff]
  %v646 = vld [vmem:[%s9 + $0x2fc] sm:$0xff]
  %v647 = vld [vmem:[%s9 + $0x304] sm:$0xff]
  %v648 = vld [vmem:[%s9 + $0x30c] sm:$0xf]
  %v649 = vld [vmem:[%s9 + $0x310] sm:$0xff]
  %v650 = vld [vmem:[%s9 + $0x318] sm:$0xff]
  %v651 = vld [vmem:[%s9 + $0x320] sm:$0xff]
  %v652 = vld [vmem:[%s9 + $0x328] sm:$0xf]
  %v653 = vld [vmem:[%s9 + $0x32c] sm:$0xff]
  %v654 = vld [vmem:[%s9 + $0x334] sm:$0xff]
  %v655 = vld [vmem:[%s9 + $0x33c] sm:$0xff]
  %v656 = vld [vmem:[%s9 + $0x344] sm:$0xf]
  %v657 = vld [vmem:[%s9 + $0x348] sm:$0xff]
  %v658 = vld [vmem:[%s9 + $0x350] sm:$0xff]
  %v659 = vld [vmem:[%s9 + $0x358] sm:$0xff]
  %v660 = vld [vmem:[%s9 + $0x360] sm:$0xf]
  %v661 = vld [vmem:[%s9 + $0x364] sm:$0xff]
  %v662 = vld [vmem:[%s9 + $0x36c] sm:$0xff]
  %v663 = vld [vmem:[%s9 + $0x374] sm:$0xff]
  %v664 = vld [vmem:[%s9 + $0x37c] sm:$0xf]
  %v665 = vld [vmem:[%s10] sm:$0x7f]
  %v667 = vlaneseq
  %v668 = vshrl.u32 %v667, 7
  %v669 = vsub.s32 0, %v668
  %v670 = vrot.slane %v665, %v669
  %v671 = vlaneseq
  %v672 = vshrl.u32 %v671, 7
  %v673 = vsub.s32 1, %v672
  %v674 = vrot.slane %v665, %v673
  %v675 = vlaneseq
  %v676 = vshrl.u32 %v675, 7
  %v677 = vsub.s32 2, %v676
  %v678 = vrot.slane %v665, %v677
  %v679 = vlaneseq
  %v680 = vshrl.u32 %v679, 7
  %v681 = vsub.s32 3, %v680
  %v682 = vrot.slane %v665, %v681
  %v683 = vlaneseq
  %v684 = vshrl.u32 %v683, 7
  %v685 = vsub.s32 4, %v684
  %v686 = vrot.slane %v665, %v685
  %v687 = vlaneseq
  %v688 = vshrl.u32 %v687, 7
  %v689 = vsub.s32 5, %v688
  %v690 = vrot.slane %v665, %v689
  %v691 = vlaneseq
  %v692 = vshrl.u32 %v691, 7
  %v693 = vsub.s32 6, %v692
  %v694 = vrot.slane %v665, %v693
  %v830 = vunpack.c.l.b16 %v537
  %v831 = vunpack.c.h.b16 %v537
  %v832 = vunpack.c.l.b16 %v538
  %v833 = vunpack.c.h.b16 %v538
  %v834 = vunpack.c.l.b16 %v539
  %v835 = vunpack.c.h.b16 %v539
  %v836 = vunpack.c.l.b16 %v540
  %v837 = vunpack.c.l.b16 %v541
  %v838 = vunpack.c.h.b16 %v541
  %v839 = vunpack.c.l.b16 %v542
  %v840 = vunpack.c.h.b16 %v542
  %v841 = vunpack.c.l.b16 %v543
  %v842 = vunpack.c.h.b16 %v543
  %v843 = vunpack.c.l.b16 %v544
  %v844 = vunpack.c.l.b16 %v545
  %v845 = vunpack.c.h.b16 %v545
  %v846 = vunpack.c.l.b16 %v546
  %v847 = vunpack.c.h.b16 %v546
  %v848 = vunpack.c.l.b16 %v547
  %v849 = vunpack.c.h.b16 %v547
  %v850 = vunpack.c.l.b16 %v548
  %v851 = vunpack.c.l.b16 %v549
  %v852 = vunpack.c.h.b16 %v549
  %v853 = vunpack.c.l.b16 %v550
  %v854 = vunpack.c.h.b16 %v550
  %v855 = vunpack.c.l.b16 %v551
  %v856 = vunpack.c.h.b16 %v551
  %v857 = vunpack.c.l.b16 %v552
  %v858 = vunpack.c.l.b16 %v553
  %v859 = vunpack.c.h.b16 %v553
  %v860 = vunpack.c.l.b16 %v554
  %v861 = vunpack.c.h.b16 %v554
  %v862 = vunpack.c.l.b16 %v555
  %v863 = vunpack.c.h.b16 %v555
  %v864 = vunpack.c.l.b16 %v556
  %v865 = vunpack.c.l.b16 %v557
  %v866 = vunpack.c.h.b16 %v557
  %v867 = vunpack.c.l.b16 %v558
  %v868 = vunpack.c.h.b16 %v558
  %v869 = vunpack.c.l.b16 %v559
  %v870 = vunpack.c.h.b16 %v559
  %v871 = vunpack.c.l.b16 %v560
  %v872 = vunpack.c.l.b16 %v561
  %v873 = vunpack.c.h.b16 %v561
  %v874 = vunpack.c.l.b16 %v562
  %v875 = vunpack.c.h.b16 %v562
  %v876 = vunpack.c.l.b16 %v563
  %v877 = vunpack.c.h.b16 %v563
  %v878 = vunpack.c.l.b16 %v564
  %v879 = vunpack.c.l.b16 %v565
  %v880 = vunpack.c.h.b16 %v565
  %v881 = vunpack.c.l.b16 %v566
  %v882 = vunpack.c.h.b16 %v566
  %v883 = vunpack.c.l.b16 %v567
  %v884 = vunpack.c.h.b16 %v567
  %v885 = vunpack.c.l.b16 %v568
  %v886 = vunpack.c.l.b16 %v569
  %v887 = vunpack.c.h.b16 %v569
  %v888 = vunpack.c.l.b16 %v570
  %v889 = vunpack.c.h.b16 %v570
  %v890 = vunpack.c.l.b16 %v571
  %v891 = vunpack.c.h.b16 %v571
  %v892 = vunpack.c.l.b16 %v572
  %v893 = vunpack.c.l.b16 %v573
  %v894 = vunpack.c.h.b16 %v573
  %v895 = vunpack.c.l.b16 %v574
  %v896 = vunpack.c.h.b16 %v574
  %v897 = vunpack.c.l.b16 %v575
  %v898 = vunpack.c.h.b16 %v575
  %v899 = vunpack.c.l.b16 %v576
  %v900 = vunpack.c.l.b16 %v577
  %v901 = vunpack.c.h.b16 %v577
  %v902 = vunpack.c.l.b16 %v578
  %v903 = vunpack.c.h.b16 %v578
  %v904 = vunpack.c.l.b16 %v579
  %v905 = vunpack.c.h.b16 %v579
  %v906 = vunpack.c.l.b16 %v580
  %v907 = vunpack.c.l.b16 %v581
  %v908 = vunpack.c.h.b16 %v581
  %v909 = vunpack.c.l.b16 %v582
  %v910 = vunpack.c.h.b16 %v582
  %v911 = vunpack.c.l.b16 %v583
  %v912 = vunpack.c.h.b16 %v583
  %v913 = vunpack.c.l.b16 %v584
  %v914 = vunpack.c.l.b16 %v585
  %v915 = vunpack.c.h.b16 %v585
  %v916 = vunpack.c.l.b16 %v586
  %v917 = vunpack.c.h.b16 %v586
  %v918 = vunpack.c.l.b16 %v587
  %v919 = vunpack.c.h.b16 %v587
  %v920 = vunpack.c.l.b16 %v588
  %v921 = vunpack.c.l.b16 %v589
  %v922 = vunpack.c.h.b16 %v589
  %v923 = vunpack.c.l.b16 %v590
  %v924 = vunpack.c.h.b16 %v590
  %v925 = vunpack.c.l.b16 %v591
  %v926 = vunpack.c.h.b16 %v591
  %v927 = vunpack.c.l.b16 %v592
  %v928 = vunpack.c.l.b16 %v593
  %v929 = vunpack.c.h.b16 %v593
  %v930 = vunpack.c.l.b16 %v594
  %v931 = vunpack.c.h.b16 %v594
  %v932 = vunpack.c.l.b16 %v595
  %v933 = vunpack.c.h.b16 %v595
  %v934 = vunpack.c.l.b16 %v596
  %v935 = vunpack.c.l.b16 %v597
  %v936 = vunpack.c.h.b16 %v597
  %v937 = vunpack.c.l.b16 %v598
  %v938 = vunpack.c.h.b16 %v598
  %v939 = vunpack.c.l.b16 %v599
  %v940 = vunpack.c.h.b16 %v599
  %v941 = vunpack.c.l.b16 %v600
  %v942 = vunpack.c.l.b16 %v601
  %v943 = vunpack.c.h.b16 %v601
  %v944 = vunpack.c.l.b16 %v602
  %v945 = vunpack.c.h.b16 %v602
  %v946 = vunpack.c.l.b16 %v603
  %v947 = vunpack.c.h.b16 %v603
  %v948 = vunpack.c.l.b16 %v604
  %v949 = vunpack.c.l.b16 %v605
  %v950 = vunpack.c.h.b16 %v605
  %v951 = vunpack.c.l.b16 %v606
  %v952 = vunpack.c.h.b16 %v606
  %v953 = vunpack.c.l.b16 %v607
  %v954 = vunpack.c.h.b16 %v607
  %v955 = vunpack.c.l.b16 %v608
  %v956 = vunpack.c.l.b16 %v609
  %v957 = vunpack.c.h.b16 %v609
  %v958 = vunpack.c.l.b16 %v610
  %v959 = vunpack.c.h.b16 %v610
  %v960 = vunpack.c.l.b16 %v611
  %v961 = vunpack.c.h.b16 %v611
  %v962 = vunpack.c.l.b16 %v612
  %v963 = vunpack.c.l.b16 %v613
  %v964 = vunpack.c.h.b16 %v613
  %v965 = vunpack.c.l.b16 %v614
  %v966 = vunpack.c.h.b16 %v614
  %v967 = vunpack.c.l.b16 %v615
  %v968 = vunpack.c.h.b16 %v615
  %v969 = vunpack.c.l.b16 %v616
  %v970 = vunpack.c.l.b16 %v617
  %v971 = vunpack.c.h.b16 %v617
  %v972 = vunpack.c.l.b16 %v618
  %v973 = vunpack.c.h.b16 %v618
  %v974 = vunpack.c.l.b16 %v619
  %v975 = vunpack.c.h.b16 %v619
  %v976 = vunpack.c.l.b16 %v620
  %v977 = vunpack.c.l.b16 %v621
  %v978 = vunpack.c.h.b16 %v621
  %v979 = vunpack.c.l.b16 %v622
  %v980 = vunpack.c.h.b16 %v622
  %v981 = vunpack.c.l.b16 %v623
  %v982 = vunpack.c.h.b16 %v623
  %v983 = vunpack.c.l.b16 %v624
  %v984 = vunpack.c.l.b16 %v625
  %v985 = vunpack.c.h.b16 %v625
  %v986 = vunpack.c.l.b16 %v626
  %v987 = vunpack.c.h.b16 %v626
  %v988 = vunpack.c.l.b16 %v627
  %v989 = vunpack.c.h.b16 %v627
  %v990 = vunpack.c.l.b16 %v628
  %v991 = vunpack.c.l.b16 %v629
  %v992 = vunpack.c.h.b16 %v629
  %v993 = vunpack.c.l.b16 %v630
  %v994 = vunpack.c.h.b16 %v630
  %v995 = vunpack.c.l.b16 %v631
  %v996 = vunpack.c.h.b16 %v631
  %v997 = vunpack.c.l.b16 %v632
  %v998 = vunpack.c.l.b16 %v633
  %v999 = vunpack.c.h.b16 %v633
  %v1000 = vunpack.c.l.b16 %v634
  %v1001 = vunpack.c.h.b16 %v634
  %v1002 = vunpack.c.l.b16 %v635
  %v1003 = vunpack.c.h.b16 %v635
  %v1004 = vunpack.c.l.b16 %v636
  %v1005 = vunpack.c.l.b16 %v637
  %v1006 = vunpack.c.h.b16 %v637
  %v1007 = vunpack.c.l.b16 %v638
  %v1008 = vunpack.c.h.b16 %v638
  %v1009 = vunpack.c.l.b16 %v639
  %v1010 = vunpack.c.h.b16 %v639
  %v1011 = vunpack.c.l.b16 %v640
  %v1012 = vunpack.c.l.b16 %v641
  %v1013 = vunpack.c.h.b16 %v641
  %v1014 = vunpack.c.l.b16 %v642
  %v1015 = vunpack.c.h.b16 %v642
  %v1016 = vunpack.c.l.b16 %v643
  %v1017 = vunpack.c.h.b16 %v643
  %v1018 = vunpack.c.l.b16 %v644
  %v1019 = vunpack.c.l.b16 %v645
  %v1020 = vunpack.c.h.b16 %v645
  %v1021 = vunpack.c.l.b16 %v646
  %v1022 = vunpack.c.h.b16 %v646
  %v1023 = vunpack.c.l.b16 %v647
  %v1024 = vunpack.c.h.b16 %v647
  %v1025 = vunpack.c.l.b16 %v648
  %v1026 = vunpack.c.l.b16 %v649
  %v1027 = vunpack.c.h.b16 %v649
  %v1028 = vunpack.c.l.b16 %v650
  %v1029 = vunpack.c.h.b16 %v650
  %v1030 = vunpack.c.l.b16 %v651
  %v1031 = vunpack.c.h.b16 %v651
  %v1032 = vunpack.c.l.b16 %v652
  %v1033 = vunpack.c.l.b16 %v653
  %v1034 = vunpack.c.h.b16 %v653
  %v1035 = vunpack.c.l.b16 %v654
  %v1036 = vunpack.c.h.b16 %v654
  %v1037 = vunpack.c.l.b16 %v655
  %v1038 = vunpack.c.h.b16 %v655
  %v1039 = vunpack.c.l.b16 %v656
  %v1040 = vunpack.c.l.b16 %v657
  %v1041 = vunpack.c.h.b16 %v657
  %v1042 = vunpack.c.l.b16 %v658
  %v1043 = vunpack.c.h.b16 %v658
  %v1044 = vunpack.c.l.b16 %v659
  %v1045 = vunpack.c.h.b16 %v659
  %v1046 = vunpack.c.l.b16 %v660
  %v1047 = vunpack.c.l.b16 %v661
  %v1048 = vunpack.c.h.b16 %v661
  %v1049 = vunpack.c.l.b16 %v662
  %v1050 = vunpack.c.h.b16 %v662
  %v1051 = vunpack.c.l.b16 %v663
  %v1052 = vunpack.c.h.b16 %v663
  %v1053 = vunpack.c.l.b16 %v664
  %v1054 = vpack.c.b16 %v837, %v830
  %v1055 = vpack.c.b16 %v838, %v831
  %v1056 = vpack.c.b16 %v839, %v832
  %v1057 = vpack.c.b16 %v840, %v833
  %v1058 = vpack.c.b16 %v841, %v834
  %v1059 = vpack.c.b16 %v842, %v835
  %v1060 = vpack.c.b16 %v843, %v836
  %v1061 = vpack.c.b16 %v851, %v844
  %v1062 = vpack.c.b16 %v852, %v845
  %v1063 = vpack.c.b16 %v853, %v846
  %v1064 = vpack.c.b16 %v854, %v847
  %v1065 = vpack.c.b16 %v855, %v848
  %v1066 = vpack.c.b16 %v856, %v849
  %v1067 = vpack.c.b16 %v857, %v850
  %v1068 = vpack.c.b16 %v865, %v858
  %v1069 = vpack.c.b16 %v866, %v859
  %v1070 = vpack.c.b16 %v867, %v860
  %v1071 = vpack.c.b16 %v868, %v861
  %v1072 = vpack.c.b16 %v869, %v862
  %v1073 = vpack.c.b16 %v870, %v863
  %v1074 = vpack.c.b16 %v871, %v864
  %v1075 = vpack.c.b16 %v879, %v872
  %v1076 = vpack.c.b16 %v880, %v873
  %v1077 = vpack.c.b16 %v881, %v874
  %v1078 = vpack.c.b16 %v882, %v875
  %v1079 = vpack.c.b16 %v883, %v876
  %v1080 = vpack.c.b16 %v884, %v877
  %v1081 = vpack.c.b16 %v885, %v878
  %v1082 = vpack.c.b16 %v893, %v886
  %v1083 = vpack.c.b16 %v894, %v887
  %v1084 = vpack.c.b16 %v895, %v888
  %v1085 = vpack.c.b16 %v896, %v889
  %v1086 = vpack.c.b16 %v897, %v890
  %v1087 = vpack.c.b16 %v898, %v891
  %v1088 = vpack.c.b16 %v899, %v892
  %v1089 = vpack.c.b16 %v907, %v900
  %v1090 = vpack.c.b16 %v908, %v901
  %v1091 = vpack.c.b16 %v909, %v902
  %v1092 = vpack.c.b16 %v910, %v903
  %v1093 = vpack.c.b16 %v911, %v904
  %v1094 = vpack.c.b16 %v912, %v905
  %v1095 = vpack.c.b16 %v913, %v906
  %v1096 = vpack.c.b16 %v921, %v914
  %v1097 = vpack.c.b16 %v922, %v915
  %v1098 = vpack.c.b16 %v923, %v916
  %v1099 = vpack.c.b16 %v924, %v917
  %v1100 = vpack.c.b16 %v925, %v918
  %v1101 = vpack.c.b16 %v926, %v919
  %v1102 = vpack.c.b16 %v927, %v920
  %v1103 = vpack.c.b16 %v935, %v928
  %v1104 = vpack.c.b16 %v936, %v929
  %v1105 = vpack.c.b16 %v937, %v930
  %v1106 = vpack.c.b16 %v938, %v931
  %v1107 = vpack.c.b16 %v939, %v932
  %v1108 = vpack.c.b16 %v940, %v933
  %v1109 = vpack.c.b16 %v941, %v934
  %v1110 = vpack.c.b16 %v949, %v942
  %v1111 = vpack.c.b16 %v950, %v943
  %v1112 = vpack.c.b16 %v951, %v944
  %v1113 = vpack.c.b16 %v952, %v945
  %v1114 = vpack.c.b16 %v953, %v946
  %v1115 = vpack.c.b16 %v954, %v947
  %v1116 = vpack.c.b16 %v955, %v948
  %v1117 = vpack.c.b16 %v963, %v956
  %v1118 = vpack.c.b16 %v964, %v957
  %v1119 = vpack.c.b16 %v965, %v958
  %v1120 = vpack.c.b16 %v966, %v959
  %v1121 = vpack.c.b16 %v967, %v960
  %v1122 = vpack.c.b16 %v968, %v961
  %v1123 = vpack.c.b16 %v969, %v962
  %v1124 = vpack.c.b16 %v977, %v970
  %v1125 = vpack.c.b16 %v978, %v971
  %v1126 = vpack.c.b16 %v979, %v972
  %v1127 = vpack.c.b16 %v980, %v973
  %v1128 = vpack.c.b16 %v981, %v974
  %v1129 = vpack.c.b16 %v982, %v975
  %v1130 = vpack.c.b16 %v983, %v976
  %v1131 = vpack.c.b16 %v991, %v984
  %v1132 = vpack.c.b16 %v992, %v985
  %v1133 = vpack.c.b16 %v993, %v986
  %v1134 = vpack.c.b16 %v994, %v987
  %v1135 = vpack.c.b16 %v995, %v988
  %v1136 = vpack.c.b16 %v996, %v989
  %v1137 = vpack.c.b16 %v997, %v990
  %v1138 = vpack.c.b16 %v1005, %v998
  %v1139 = vpack.c.b16 %v1006, %v999
  %v1140 = vpack.c.b16 %v1007, %v1000
  %v1141 = vpack.c.b16 %v1008, %v1001
  %v1142 = vpack.c.b16 %v1009, %v1002
  %v1143 = vpack.c.b16 %v1010, %v1003
  %v1144 = vpack.c.b16 %v1011, %v1004
  %v1145 = vpack.c.b16 %v1019, %v1012
  %v1146 = vpack.c.b16 %v1020, %v1013
  %v1147 = vpack.c.b16 %v1021, %v1014
  %v1148 = vpack.c.b16 %v1022, %v1015
  %v1149 = vpack.c.b16 %v1023, %v1016
  %v1150 = vpack.c.b16 %v1024, %v1017
  %v1151 = vpack.c.b16 %v1025, %v1018
  %v1152 = vpack.c.b16 %v1033, %v1026
  %v1153 = vpack.c.b16 %v1034, %v1027
  %v1154 = vpack.c.b16 %v1035, %v1028
  %v1155 = vpack.c.b16 %v1036, %v1029
  %v1156 = vpack.c.b16 %v1037, %v1030
  %v1157 = vpack.c.b16 %v1038, %v1031
  %v1158 = vpack.c.b16 %v1039, %v1032
  %v1159 = vpack.c.b16 %v1047, %v1040
  %v1160 = vpack.c.b16 %v1048, %v1041
  %v1161 = vpack.c.b16 %v1049, %v1042
  %v1162 = vpack.c.b16 %v1050, %v1043
  %v1163 = vpack.c.b16 %v1051, %v1044
  %v1164 = vpack.c.b16 %v1052, %v1045
  %v1165 = vpack.c.b16 %v1053, %v1046
  %1278 = vmatprep.subr.bf16.mxu0 %v1055
  %1279 = vmatpush1.bf16.msra.mxu0 %v1054
  %1280 = vmatprep.subr.bf16.mxu0 %v1062
  %1281 = vmatpush1.bf16.msra.mxu0 %v1061
  %1282 = vmatprep.subr.bf16.mxu0 %v1069
  %1283 = vmatpush1.bf16.msra.mxu0 %v1068
  %1284 = vmatprep.subr.bf16.mxu0 %v1076
  %1285 = vmatpush1.bf16.msra.mxu0 %v1075
  %1286 = vmatprep.subr.bf16.mxu0 %v1083
  %1287 = vmatpush1.bf16.msra.mxu0 %v1082
  %1288 = vmatprep.subr.bf16.mxu0 %v1090
  %1289 = vmatpush1.bf16.msra.mxu0 %v1089
  %1290 = vmatprep.subr.bf16.mxu0 %v1097
  %1291 = vmatpush1.bf16.msra.mxu0 %v1096
  %1292 = vmatprep.subr.bf16.mxu0 %v1104
  %1293 = vmatpush1.bf16.msra.mxu0 %v1103
  %1294 = vmatprep.subr.bf16.mxu0 %v1111
  %1295 = vmatpush1.bf16.msra.mxu0 %v1110
  %1296 = vmatprep.subr.bf16.mxu0 %v1118
  %1297 = vmatpush1.bf16.msra.mxu0 %v1117
  %1298 = vmatprep.subr.bf16.mxu0 %v1125
  %1299 = vmatpush1.bf16.msra.mxu0 %v1124
  %1300 = vmatprep.subr.bf16.mxu0 %v1132
  %1301 = vmatpush1.bf16.msra.mxu0 %v1131
  %1302 = vmatprep.subr.bf16.mxu0 %v1139
  %1303 = vmatpush1.bf16.msra.mxu0 %v1138
  %1304 = vmatprep.subr.bf16.mxu0 %v1146
  %1305 = vmatpush1.bf16.msra.mxu0 %v1145
  %1306 = vmatprep.subr.bf16.mxu0 %v1153
  %1307 = vmatpush1.bf16.msra.mxu0 %v1152
  %1308 = vmatprep.subr.bf16.mxu0 %v1160
  %1309 = vmatpush1.bf16.msra.mxu0 %v1159
  %1310 = vmatprep.mubr.bf16.mxu0 %v536
  %1311 = vmatmul.mubr.bf16.gmra.mrb[0].mxu0 %v535
  %v1312 = vpop.f32.mrb[0].mxu0
  %v1313 = vadd.f32 %v670, %v1312
  %v1314 = vpop.f32.mrb[0].mxu0
  %v1315 = vadd.f32 %v674, %v1314
  %v1316 = vpop.f32.mrb[0].mxu0
  %v1317 = vpop.f32.mrb[0].mxu0
  %1318 = vdwg.mxu0
  %1319 = vmatprep.subr.bf16.mxu0 %v1057
  %1320 = vmatpush1.bf16.msra.mxu0 %v1056
  %1321 = vmatprep.subr.bf16.mxu0 %v1064
  %1322 = vmatpush1.bf16.msra.mxu0 %v1063
  %1323 = vmatprep.subr.bf16.mxu0 %v1071
  %1324 = vmatpush1.bf16.msra.mxu0 %v1070
  %1325 = vmatprep.subr.bf16.mxu0 %v1078
  %1326 = vmatpush1.bf16.msra.mxu0 %v1077
  %1327 = vmatprep.subr.bf16.mxu0 %v1085
  %1328 = vmatpush1.bf16.msra.mxu0 %v1084
  %1329 = vmatprep.subr.bf16.mxu0 %v1092
  %1330 = vmatpush1.bf16.msra.mxu0 %v1091
  %1331 = vmatprep.subr.bf16.mxu0 %v1099
  %1332 = vmatpush1.bf16.msra.mxu0 %v1098
  %1333 = vmatprep.subr.bf16.mxu0 %v1106
  %1334 = vmatpush1.bf16.msra.mxu0 %v1105
  %1335 = vmatprep.subr.bf16.mxu0 %v1113
  %1336 = vmatpush1.bf16.msra.mxu0 %v1112
  %1337 = vmatprep.subr.bf16.mxu0 %v1120
  %1338 = vmatpush1.bf16.msra.mxu0 %v1119
  %1339 = vmatprep.subr.bf16.mxu0 %v1127
  %1340 = vmatpush1.bf16.msra.mxu0 %v1126
  %1341 = vmatprep.subr.bf16.mxu0 %v1134
  %1342 = vmatpush1.bf16.msra.mxu0 %v1133
  %1343 = vmatprep.subr.bf16.mxu0 %v1141
  %1344 = vmatpush1.bf16.msra.mxu0 %v1140
  %1345 = vmatprep.subr.bf16.mxu0 %v1148
  %1346 = vmatpush1.bf16.msra.mxu0 %v1147
  %1347 = vmatprep.subr.bf16.mxu0 %v1155
  %1348 = vmatpush1.bf16.msra.mxu0 %v1154
  %1349 = vmatprep.subr.bf16.mxu0 %v1162
  %1350 = vmatpush1.bf16.msra.mxu0 %v1161
  %1351 = vmatprep.mubr.bf16.mxu0 %v536
  %1352 = vmatmul.mubr.bf16.gmra.mrb[0].mxu0 %v535
  %v1353 = vpop.f32.mrb[0].mxu0
  %v1354 = vadd.f32 %v678, %v1353
  %v1355 = vpop.f32.mrb[0].mxu0
  %v1356 = vadd.f32 %v682, %v1355
  %v1357 = vpop.f32.mrb[0].mxu0
  %v1358 = vpop.f32.mrb[0].mxu0
  %1359 = vdwg.mxu0
  %1360 = vmatprep.subr.bf16.mxu0 %v1059
  %1361 = vmatpush1.bf16.msra.mxu0 %v1058
  %1362 = vmatprep.subr.bf16.mxu0 %v1066
  %1363 = vmatpush1.bf16.msra.mxu0 %v1065
  %1364 = vmatprep.subr.bf16.mxu0 %v1073
  %1365 = vmatpush1.bf16.msra.mxu0 %v1072
  %1366 = vmatprep.subr.bf16.mxu0 %v1080
  %1367 = vmatpush1.bf16.msra.mxu0 %v1079
  %1368 = vmatprep.subr.bf16.mxu0 %v1087
  %1369 = vmatpush1.bf16.msra.mxu0 %v1086
  %1370 = vmatprep.subr.bf16.mxu0 %v1094
  %1371 = vmatpush1.bf16.msra.mxu0 %v1093
  %1372 = vmatprep.subr.bf16.mxu0 %v1101
  %1373 = vmatpush1.bf16.msra.mxu0 %v1100
  %1374 = vmatprep.subr.bf16.mxu0 %v1108
  %1375 = vmatpush1.bf16.msra.mxu0 %v1107
  %1376 = vmatprep.subr.bf16.mxu0 %v1115
  %1377 = vmatpush1.bf16.msra.mxu0 %v1114
  %1378 = vmatprep.subr.bf16.mxu0 %v1122
  %1379 = vmatpush1.bf16.msra.mxu0 %v1121
  %1380 = vmatprep.subr.bf16.mxu0 %v1129
  %1381 = vmatpush1.bf16.msra.mxu0 %v1128
  %1382 = vmatprep.subr.bf16.mxu0 %v1136
  %1383 = vmatpush1.bf16.msra.mxu0 %v1135
  %1384 = vmatprep.subr.bf16.mxu0 %v1143
  %1385 = vmatpush1.bf16.msra.mxu0 %v1142
  %1386 = vmatprep.subr.bf16.mxu0 %v1150
  %1387 = vmatpush1.bf16.msra.mxu0 %v1149
  %1388 = vmatprep.subr.bf16.mxu0 %v1157
  %1389 = vmatpush1.bf16.msra.mxu0 %v1156
  %1390 = vmatprep.subr.bf16.mxu0 %v1164
  %1391 = vmatpush1.bf16.msra.mxu0 %v1163
  %1392 = vmatprep.mubr.bf16.mxu0 %v536
  %1393 = vmatmul.mubr.bf16.gmra.mrb[0].mxu0 %v535
  %v1394 = vpop.f32.mrb[0].mxu0
  %v1395 = vadd.f32 %v686, %v1394
  %v1396 = vpop.f32.mrb[0].mxu0
  %v1397 = vadd.f32 %v690, %v1396
  %v1398 = vpop.f32.mrb[0].mxu0
  %v1399 = vpop.f32.mrb[0].mxu0
  %1400 = vdwg.mxu0
  %1401 = vmatprep.subr.bf16.mxu0 0
  %1402 = vmatpush1.bf16.msra.mxu0 %v1060
  %1403 = vmatprep.subr.bf16.mxu0 0
  %1404 = vmatpush1.bf16.msra.mxu0 %v1067
  %1405 = vmatprep.subr.bf16.mxu0 0
  %1406 = vmatpush1.bf16.msra.mxu0 %v1074
  %1407 = vmatprep.subr.bf16.mxu0 0
  %1408 = vmatpush1.bf16.msra.mxu0 %v1081
  %1409 = vmatprep.subr.bf16.mxu0 0
  %1410 = vmatpush1.bf16.msra.mxu0 %v1088
  %1411 = vmatprep.subr.bf16.mxu0 0
  %1412 = vmatpush1.bf16.msra.mxu0 %v1095
  %1413 = vmatprep.subr.bf16.mxu0 0
  %1414 = vmatpush1.bf16.msra.mxu0 %v1102
  %1415 = vmatprep.subr.bf16.mxu0 0
  %1416 = vmatpush1.bf16.msra.mxu0 %v1109
  %1417 = vmatprep.subr.bf16.mxu0 0
  %1418 = vmatpush1.bf16.msra.mxu0 %v1116
  %1419 = vmatprep.subr.bf16.mxu0 0
  %1420 = vmatpush1.bf16.msra.mxu0 %v1123
  %1421 = vmatprep.subr.bf16.mxu0 0
  %1422 = vmatpush1.bf16.msra.mxu0 %v1130
  %1423 = vmatprep.subr.bf16.mxu0 0
  %1424 = vmatpush1.bf16.msra.mxu0 %v1137
  %1425 = vmatprep.subr.bf16.mxu0 0
  %1426 = vmatpush1.bf16.msra.mxu0 %v1144
  %1427 = vmatprep.subr.bf16.mxu0 0
  %1428 = vmatpush1.bf16.msra.mxu0 %v1151
  %1429 = vmatprep.subr.bf16.mxu0 0
  %1430 = vmatpush1.bf16.msra.mxu0 %v1158
  %1431 = vmatprep.subr.bf16.mxu0 0
  %1432 = vmatpush1.bf16.msra.mxu0 %v1165
  %1433 = vmatprep.mubr.bf16.mxu0 %v536
  %1434 = vmatmul.mubr.bf16.gmra.mrb[0].mxu0 %v535
  %v1435 = vpop.f32.mrb[0].mxu0
  %v1436 = vadd.f32 %v694, %v1435
  %v1437 = vpop.f32.mrb[0].mxu0
  %v1438 = vpop.f32.mrb[0].mxu0
  %v1439 = vpop.f32.mrb[0].mxu0
  %1440 = vdwg.mxu0
  %v1441 = vtanh.pop %v1313
  %v1442 = vtanh.pop %v1315
  %v1443 = vtanh.pop %v1354
  %v1444 = vtanh.pop %v1356
  %v1445 = vtanh.pop %v1395
  %v1446 = vtanh.pop %v1397
  %v1447 = vtanh.pop %v1436
  %1448 = vst [vmem:[%s11] sm:$0xff] %v1441
  %1449 = vst [vmem:[%s11 + $0x8] sm:$0xff] %v1442
  %1450 = vst [vmem:[%s11 + $0x10] sm:$0xff] %v1443
  %1451 = vst [vmem:[%s11 + $0x18] sm:$0xff] %v1444
  %1452 = vst [vmem:[%s11 + $0x20] sm:$0xff] %v1445
  %1453 = vst [vmem:[%s11 + $0x28] sm:$0xff] %v1446
  %vm1454 = vcmask 130048
  %1455 = vst.msk [vmem:[%s11 + $0x30] sm:$0xff] %vm1454, %v1447
  // Predicated region
  $region46: #{generator_forward.1} parent=0 // pred_check
    _
  $region47: #{generator_forward.1} parent=0 // pred_check_branch
    %1457 = sbr.rel (0) target = $region49
  $region48: #{generator_forward.1} parent=0 // pred_region
    _
  $region49: #{generator_forward.1} parent=0 // pred_fallthru
    _
  // Predicated region
  $region50: #{generator_forward.1} parent=0 // pred_check
    _
  $region51: #{generator_forward.1} parent=0 // pred_check_branch
    %1459 = sbr.rel (0) target = $region53
  $region52: #{generator_forward.1} parent=0 // pred_region
    _
  $region53: #{generator_forward.1} parent=0 // pred_fallthru
    _

</llo_original>
